<compile_context>
chip_gen: v5e
topology: v5e:2x2
jax: 0.10.0
libtpu: 0.0.40
codegen_flags: <defaults>
</compile_context>

<pallas_src>
import jax
import jax.numpy as jnp
from jax import lax
from jax.experimental import pallas as pl
from jax.experimental.pallas import tpu as pltpu


def _poscnn_kernel(x_ref, w_ref, b_ref, o_ref, xpad_ref):
    # x_ref   : (1, H, W, TC)   unpadded input block (single HBM read)
    # w_ref   : (9, TC)         depthwise 3x3 weights, tap-major (3*dh + dw)
    # b_ref   : (1, TC)         bias (f32)
    # o_ref   : (1, H, W, TC)   output block
    # xpad_ref: (H+2, Wp, TC)   VMEM scratch; rows 0 / H+1 and cols [W:Wp) zero
    H = x_ref.shape[1]
    W = x_ref.shape[2]
    TC = x_ref.shape[3]
    Wp = xpad_ref.shape[1]
    dt = x_ref.dtype

    # Refresh the zero halo every grid step: the scratch persists across grid
    # steps and both grid axes are "parallel" (megacore-sharded), so an
    # init-once conditional on program_id would not be safe.
    xpad_ref[0:1, :, :] = jnp.zeros((1, Wp, TC), dt)
    xpad_ref[H + 1:H + 2, :, :] = jnp.zeros((1, Wp, TC), dt)
    xpad_ref[1:H + 1, W:Wp, :] = jnp.zeros((H, Wp - W, TC), dt)
    # Interior copy: offset 0 on the sublane (W) and lane (C) axes (aligned);
    # the +1 row offset is pure major-axis addressing.
    xpad_ref[1:H + 1, 0:W, :] = x_ref[0]

    b32 = b_ref[...].astype(jnp.float32)                     # (1, TC)

    # Row-chunked compute: live f32 values stay at ~RH*Wp*TC regardless of H.
    RH = 8 if H % 8 == 0 else H
    flat = RH * Wp
    for r0 in range(0, H, RH):
        acc = None
        for dh in range(3):
            rows = xpad_ref[r0 + dh:r0 + dh + RH, :, :]       # (RH, Wp, TC)
            rows2 = rows.reshape(flat, TC)                    # free: Wp%8==0
            for dw in range(3):
                # output col w needs xpad col (w - 1 + dw): roll by (1 - dw).
                # Wrap-around (row boundaries / w == 0) only ever brings in
                # the zero columns [W:Wp), so zero padding is exact.
                shift = (1 - dw) % flat
                sh = pltpu.roll(rows2, shift, axis=0) if shift else rows2
                wgt = w_ref[3 * dh + dw:3 * dh + dw + 1, :]   # (1, TC)
                term = sh * wgt                               # activation dtype
                acc = term.astype(jnp.float32) if acc is None else acc + term
        acc3 = acc.reshape(RH, Wp, TC)
        res = (acc3[:, 0:W, :]
               + b32                                          # (1, TC) bcast
               + x_ref[0, r0:r0 + RH, :, :].astype(jnp.float32))  # residual
        o_ref[0, r0:r0 + RH, :, :] = res.astype(o_ref.dtype)


def poscnn_forward(x_tokens, weight, bias, H, W, s=1):
    """PosCNN forward.

    x_tokens: (B, N, C) tokens with N = H * W.
    weight  : (C, 1, 3, 3) depthwise conv weight (PyTorch OIHW, groups=C).
    bias    : (C,).
    Returns (B, N, C).
    """
    # TODO(synk): only the s == 1 (stride-1 + residual) path is implemented.
    assert s == 1, "only s=1 supported in this Pallas kernel"
    B, N, C = x_tokens.shape
    assert N == H * W

    # (B, N, C) -> NHWC is a free reshape (same memory order); no jnp.pad pass.
    x_nhwc = x_tokens.reshape(B, H, W, C)
    # (C, 1, 3, 3) -> (3, 3, C) -> (9, C), tap-major; keep in activation dtype
    # so the per-tap multiply runs at input precision (f32 accumulation).
    w_tap = jnp.transpose(weight[:, 0, :, :], (1, 2, 0)).reshape(9, C)
    w_tap = w_tap.astype(x_tokens.dtype)
    b_2d = bias.reshape(1, C).astype(jnp.float32)             # tiny; keep f32

    # Channel tiling: lane-dense 128-wide tiles when possible (halo-free axis).
    TC = 128 if (C % 128 == 0) else C
    n_ct = C // TC
    # Scratch width: >= W + 2, rounded up to a multiple of 8 (full sublanes).
    Wp = ((W + 2 + 7) // 8) * 8

    out_nhwc = pl.pallas_call(
        _poscnn_kernel,
        out_shape=jax.ShapeDtypeStruct((B, H, W, C), x_tokens.dtype),
        grid_spec=pltpu.PrefetchScalarGridSpec(
            num_scalar_prefetch=0,
            grid=(B, n_ct),
            in_specs=[
                pl.BlockSpec((1, H, W, TC), lambda b, c: (b, 0, 0, c)),
                pl.BlockSpec((9, TC), lambda b, c: (0, c)),
                pl.BlockSpec((1, TC), lambda b, c: (0, c)),
            ],
            out_specs=pl.BlockSpec((1, H, W, TC), lambda b, c: (b, 0, 0, c)),
            scratch_shapes=[pltpu.VMEM((H + 2, Wp, TC), x_tokens.dtype)],
        ),
        compiler_params=pltpu.CompilerParams(
            dimension_semantics=("parallel", "parallel"),
            vmem_limit_bytes=32 * 1024 * 1024,
        ),
    )(x_nhwc, w_tap, b_2d)

    # NHWC -> (B, N, C): matches x.flatten(2).transpose(1, 2) on NCHW output.
    return out_nhwc.reshape(B, N, C)


def _reference(x_tokens, weight, bias, H, W):
    """Pure-JAX reference (depthwise conv, NCHW) mirroring the PyTorch module."""
    B, N, C = x_tokens.shape
    cnn_feat = jnp.transpose(x_tokens, (0, 2, 1)).reshape(B, C, H, W)
    y = lax.conv_general_dilated(
        cnn_feat, weight, window_strides=(1, 1), padding=((1, 1), (1, 1)),
        dimension_numbers=("NCHW", "OIHW", "NCHW"), feature_group_count=C,
        precision=lax.Precision.HIGHEST)
    y = y + bias.reshape(1, C, 1, 1) + cnn_feat
    return jnp.transpose(y.reshape(B, C, H * W), (0, 2, 1))


if __name__ == "__main__":
    B, H, W, C = 2, 8, 8, 128      # small PVT-like stage; C multiple of 128
    N = H * W
    key = jax.random.PRNGKey(0)
    k1, k2, k3 = jax.random.split(key, 3)
    x = jax.random.normal(k1, (B, N, C), dtype=jnp.float32)
    weight = jax.random.normal(k2, (C, 1, 3, 3), dtype=jnp.float32) * 0.1
    bias = jax.random.normal(k3, (C,), dtype=jnp.float32) * 0.1

    out = jax.block_until_ready(poscnn_forward(x, weight, bias, H, W, s=1))
    ref = jax.block_until_ready(_reference(x, weight, bias, H, W))
    assert out.shape == (B, N, C)
    err = float(jnp.max(jnp.abs(out - ref)))
    assert err < 1e-3, f"mismatch vs reference: max abs err = {err}"
    print("KERNEL_OK")
</pallas_src>

<mosaic_0001>
module attributes {stable_mosaic.version = 11 : i64} {
  func.func @_poscnn_kernel(%arg0: i32, %arg1: i32, %arg2: memref<1x8x8x128xf32, #tpu.memory_space<vmem>>, %arg3: memref<9x128xf32, #tpu.memory_space<vmem>>, %arg4: memref<1x128xf32, #tpu.memory_space<vmem>>, %arg5: memref<1x8x8x128xf32, #tpu.memory_space<vmem>>, %arg6: memref<10x16x128xf32, #tpu.memory_space<vmem>>) attributes {dimension_semantics = [#tpu.dimension_semantics<parallel>, #tpu.dimension_semantics<parallel>], iteration_bounds = array<i64: 2, 1>, scalar_prefetch = 0 : i64, scratch_operands = 1 : i64, tpu.core_type = #tpu.core_type<tc>, window_params = [{transform_indices = @transform_0, window_bounds = array<i64: 1, 8, 8, 128>}, {transform_indices = @transform_1, window_bounds = array<i64: 9, 128>}, {transform_indices = @transform_2, window_bounds = array<i64: 1, 128>}, {transform_indices = @transform_3, window_bounds = array<i64: 1, 8, 8, 128>}]} {
    %cst = arith.constant 0.000000e+00 : f32
    %0 = vector.broadcast %cst : f32 to vector<1x16x128xf32>
    %c0 = arith.constant 0 : index
    %c0_0 = arith.constant 0 : index
    %c0_1 = arith.constant 0 : index
    %1 = vector.load %arg6[%c0, %c0_0, %c0_1] : memref<10x16x128xf32, #tpu.memory_space<vmem>>, vector<1x16x128xf32>
    tpu.vector_store %arg6[%c0, %c0_0, %c0_1], %0 {strides = array<i32>} : memref<10x16x128xf32, #tpu.memory_space<vmem>>, vector<1x16x128xf32>,
    %cst_2 = arith.constant 0.000000e+00 : f32
    %2 = vector.broadcast %cst_2 : f32 to vector<1x16x128xf32>
    %c9 = arith.constant 9 : index
    %c0_3 = arith.constant 0 : index
    %c0_4 = arith.constant 0 : index
    %3 = vector.load %arg6[%c9, %c0_3, %c0_4] : memref<10x16x128xf32, #tpu.memory_space<vmem>>, vector<1x16x128xf32>
    tpu.vector_store %arg6[%c9, %c0_3, %c0_4], %2 {strides = array<i32>} : memref<10x16x128xf32, #tpu.memory_space<vmem>>, vector<1x16x128xf32>,
    %cst_5 = arith.constant 0.000000e+00 : f32
    %4 = vector.broadcast %cst_5 : f32 to vector<8x8x128xf32>
    %c1 = arith.constant 1 : index
    %c8 = arith.constant 8 : index
    %c0_6 = arith.constant 0 : index
    %5 = vector.load %arg6[%c1, %c8, %c0_6] : memref<10x16x128xf32, #tpu.memory_space<vmem>>, vector<8x8x128xf32>
    tpu.vector_store %arg6[%c1, %c8, %c0_6], %4 {strides = array<i32>} : memref<10x16x128xf32, #tpu.memory_space<vmem>>, vector<8x8x128xf32>,
    %c0_7 = arith.constant 0 : index
    %c0_8 = arith.constant 0 : index
    %c0_9 = arith.constant 0 : index
    %c0_10 = arith.constant 0 : index
    %6 = vector.load %arg2[%c0_7, %c0_8, %c0_9, %c0_10] : memref<1x8x8x128xf32, #tpu.memory_space<vmem>>, vector<1x8x8x128xf32>
    %7 = vector.shape_cast %6 : vector<1x8x8x128xf32> to vector<8x8x128xf32>
    %c1_11 = arith.constant 1 : index
    %c0_12 = arith.constant 0 : index
    %c0_13 = arith.constant 0 : index
    %8 = vector.load %arg6[%c1_11, %c0_12, %c0_13] : memref<10x16x128xf32, #tpu.memory_space<vmem>>, vector<8x8x128xf32>
    tpu.vector_store %arg6[%c1_11, %c0_12, %c0_13], %7 {strides = array<i32>} : memref<10x16x128xf32, #tpu.memory_space<vmem>>, vector<8x8x128xf32>,
    %c0_14 = arith.constant 0 : index
    %c0_15 = arith.constant 0 : index
    %9 = vector.load %arg4[%c0_14, %c0_15] : memref<1x128xf32, #tpu.memory_space<vmem>>, vector<1x128xf32>
    %c0_16 = arith.constant 0 : index
    %c0_17 = arith.constant 0 : index
    %c0_18 = arith.constant 0 : index
    %10 = vector.load %arg6[%c0_16, %c0_17, %c0_18] : memref<10x16x128xf32, #tpu.memory_space<vmem>>, vector<8x16x128xf32>
    %11 = vector.shape_cast %10 : vector<8x16x128xf32> to vector<128x128xf32>
    %c1_i32 = arith.constant 1 : i32
    %12 = tpu.dynamic_rotate %11 by %c1_i32 dim 0 : vector<128x128xf32>, i32 -> vector<128x128xf32>
    %c0_19 = arith.constant 0 : index
    %c0_20 = arith.constant 0 : index
    %13 = vector.load %arg3[%c0_19, %c0_20] : memref<9x128xf32, #tpu.memory_space<vmem>>, vector<1x128xf32>
    %14 = vector.broadcast %13 : vector<1x128xf32> to vector<128x128xf32>
    %15 = arith.mulf %12, %14 : vector<128x128xf32>
    %c1_21 = arith.constant 1 : index
    %c0_22 = arith.constant 0 : index
    %16 = vector.load %arg3[%c1_21, %c0_22] : memref<9x128xf32, #tpu.memory_space<vmem>>, vector<1x128xf32>
    %17 = vector.broadcast %16 : vector<1x128xf32> to vector<128x128xf32>
    %18 = arith.mulf %11, %17 : vector<128x128xf32>
    %19 = arith.addf %15, %18 : vector<128x128xf32>
    %c127_i32 = arith.constant 127 : i32
    %20 = tpu.dynamic_rotate %11 by %c127_i32 dim 0 : vector<128x128xf32>, i32 -> vector<128x128xf32>
    %c2 = arith.constant 2 : index
    %c0_23 = arith.constant 0 : index
    %21 = vector.load %arg3[%c2, %c0_23] : memref<9x128xf32, #tpu.memory_space<vmem>>, vector<1x128xf32>
    %22 = vector.broadcast %21 : vector<1x128xf32> to vector<128x128xf32>
    %23 = arith.mulf %20, %22 : vector<128x128xf32>
    %24 = arith.addf %19, %23 : vector<128x128xf32>
    %c1_24 = arith.constant 1 : index
    %c0_25 = arith.constant 0 : index
    %c0_26 = arith.constant 0 : index
    %25 = vector.load %arg6[%c1_24, %c0_25, %c0_26] : memref<10x16x128xf32, #tpu.memory_space<vmem>>, vector<8x16x128xf32>
    %26 = vector.shape_cast %25 : vector<8x16x128xf32> to vector<128x128xf32>
    %c1_i32_27 = arith.constant 1 : i32
    %27 = tpu.dynamic_rotate %26 by %c1_i32_27 dim 0 : vector<128x128xf32>, i32 -> vector<128x128xf32>
    %c3 = arith.constant 3 : index
    %c0_28 = arith.constant 0 : index
    %28 = vector.load %arg3[%c3, %c0_28] : memref<9x128xf32, #tpu.memory_space<vmem>>, vector<1x128xf32>
    %29 = vector.broadcast %28 : vector<1x128xf32> to vector<128x128xf32>
    %30 = arith.mulf %27, %29 : vector<128x128xf32>
    %31 = arith.addf %24, %30 : vector<128x128xf32>
    %c4 = arith.constant 4 : index
    %c0_29 = arith.constant 0 : index
    %32 = vector.load %arg3[%c4, %c0_29] : memref<9x128xf32, #tpu.memory_space<vmem>>, vector<1x128xf32>
    %33 = vector.broadcast %32 : vector<1x128xf32> to vector<128x128xf32>
    %34 = arith.mulf %26, %33 : vector<128x128xf32>
    %35 = arith.addf %31, %34 : vector<128x128xf32>
    %c127_i32_30 = arith.constant 127 : i32
    %36 = tpu.dynamic_rotate %26 by %c127_i32_30 dim 0 : vector<128x128xf32>, i32 -> vector<128x128xf32>
    %c5 = arith.constant 5 : index
    %c0_31 = arith.constant 0 : index
    %37 = vector.load %arg3[%c5, %c0_31] : memref<9x128xf32, #tpu.memory_space<vmem>>, vector<1x128xf32>
    %38 = vector.broadcast %37 : vector<1x128xf32> to vector<128x128xf32>
    %39 = arith.mulf %36, %38 : vector<128x128xf32>
    %40 = arith.addf %35, %39 : vector<128x128xf32>
    %c2_32 = arith.constant 2 : index
    %c0_33 = arith.constant 0 : index
    %c0_34 = arith.constant 0 : index
    %41 = vector.load %arg6[%c2_32, %c0_33, %c0_34] : memref<10x16x128xf32, #tpu.memory_space<vmem>>, vector<8x16x128xf32>
    %42 = vector.shape_cast %41 : vector<8x16x128xf32> to vector<128x128xf32>
    %c1_i32_35 = arith.constant 1 : i32
    %43 = tpu.dynamic_rotate %42 by %c1_i32_35 dim 0 : vector<128x128xf32>, i32 -> vector<128x128xf32>
    %c6 = arith.constant 6 : index
    %c0_36 = arith.constant 0 : index
    %44 = vector.load %arg3[%c6, %c0_36] : memref<9x128xf32, #tpu.memory_space<vmem>>, vector<1x128xf32>
    %45 = vector.broadcast %44 : vector<1x128xf32> to vector<128x128xf32>
    %46 = arith.mulf %43, %45 : vector<128x128xf32>
    %47 = arith.addf %40, %46 : vector<128x128xf32>
    %c7 = arith.constant 7 : index
    %c0_37 = arith.constant 0 : index
    %48 = vector.load %arg3[%c7, %c0_37] : memref<9x128xf32, #tpu.memory_space<vmem>>, vector<1x128xf32>
    %49 = vector.broadcast %48 : vector<1x128xf32> to vector<128x128xf32>
    %50 = arith.mulf %42, %49 : vector<128x128xf32>
    %51 = arith.addf %47, %50 : vector<128x128xf32>
    %c127_i32_38 = arith.constant 127 : i32
    %52 = tpu.dynamic_rotate %42 by %c127_i32_38 dim 0 : vector<128x128xf32>, i32 -> vector<128x128xf32>
    %c8_39 = arith.constant 8 : index
    %c0_40 = arith.constant 0 : index
    %53 = vector.load %arg3[%c8_39, %c0_40] : memref<9x128xf32, #tpu.memory_space<vmem>>, vector<1x128xf32>
    %54 = vector.broadcast %53 : vector<1x128xf32> to vector<128x128xf32>
    %55 = arith.mulf %52, %54 : vector<128x128xf32>
    %56 = arith.addf %51, %55 : vector<128x128xf32>
    %57 = vector.shape_cast %56 : vector<128x128xf32> to vector<8x16x128xf32>
    %58 = vector.extract_strided_slice %57 {offsets = [0, 0, 0], sizes = [8, 8, 128], strides = [1, 1, 1]} : vector<8x16x128xf32> to vector<8x8x128xf32>
    %59 = vector.shape_cast %9 : vector<1x128xf32> to vector<1x1x128xf32>
    %60 = vector.broadcast %59 : vector<1x1x128xf32> to vector<8x8x128xf32>
    %61 = arith.addf %58, %60 : vector<8x8x128xf32>
    %c0_41 = arith.constant 0 : index
    %c0_42 = arith.constant 0 : index
    %c0_43 = arith.constant 0 : index
    %c0_44 = arith.constant 0 : index
    %62 = vector.load %arg2[%c0_41, %c0_42, %c0_43, %c0_44] : memref<1x8x8x128xf32, #tpu.memory_space<vmem>>, vector<1x8x8x128xf32>
    %63 = vector.shape_cast %62 : vector<1x8x8x128xf32> to vector<8x8x128xf32>
    %64 = arith.addf %61, %63 : vector<8x8x128xf32>
    %c0_45 = arith.constant 0 : index
    %c0_46 = arith.constant 0 : index
    %c0_47 = arith.constant 0 : index
    %c0_48 = arith.constant 0 : index
    %65 = vector.load %arg5[%c0_45, %c0_46, %c0_47, %c0_48] : memref<1x8x8x128xf32, #tpu.memory_space<vmem>>, vector<1x8x8x128xf32>
    %66 = vector.shape_cast %65 : vector<1x8x8x128xf32> to vector<8x8x128xf32>
    %67 = vector.shape_cast %64 : vector<8x8x128xf32> to vector<1x8x8x128xf32>
    tpu.vector_store %arg5[%c0_45, %c0_46, %c0_47, %c0_48], %67 {strides = array<i32>} : memref<1x8x8x128xf32, #tpu.memory_space<vmem>>, vector<1x8x8x128xf32>,
    return
  }
  func.func @transform_0(%arg0: i32, %arg1: i32) -> (i32, i32, i32, i32) {
    %c0_i32 = arith.constant 0 : i32
    %c0_i32_0 = arith.constant 0 : i32
    %c0_i32_1 = arith.constant 0 : i32
    return %arg0, %c0_i32, %c0_i32_0, %arg1 : i32, i32, i32, i32
  }
  func.func @transform_1(%arg0: i32, %arg1: i32) -> (i32, i32) {
    %c0_i32 = arith.constant 0 : i32
    %c0_i32_0 = arith.constant 0 : i32
    return %c0_i32, %arg1 : i32, i32
  }
  func.func @transform_2(%arg0: i32, %arg1: i32) -> (i32, i32) {
    %c0_i32 = arith.constant 0 : i32
    %c0_i32_0 = arith.constant 0 : i32
    return %c0_i32, %arg1 : i32, i32
  }
  func.func @transform_3(%arg0: i32, %arg1: i32) -> (i32, i32, i32, i32) {
    %c0_i32 = arith.constant 0 : i32
    %c0_i32_0 = arith.constant 0 : i32
    %c0_i32_1 = arith.constant 0 : i32
    return %arg0, %c0_i32, %c0_i32_0, %arg1 : i32, i32, i32, i32
  }
}

</mosaic_0001>

<llo_original>
// kernel: tpu_custom_call.1
$region0: #{tpu_custom_call.1}
  #allocation0 [shape = 'u32[]', space=smem, size = 0x4, offset = 0x4, fixed_abs, tag = 'smem constant byte address 0x4 - core index']
  #allocation1 [shape = 'u32[72,128]{1,0:T(1,128)}', space=vmem, size = 0x9000, scoped, tag = 'internal scratch']
  #allocation2 [shape = 'f32[10,16,128]{2,1,0:T(8,128)}', space=vmem, size = 0x14000, scoped, tag = 'scratch operand']
  %s0 = inlined_call_operand.hbm [shape: f32[2,8,8,128], index: 0, kind: input, shape index: {}]
  %s1 = inlined_call_operand.hbm [shape: f32[9,128], index: 1, kind: input, shape index: {}]
  %s2 = inlined_call_operand.vmem [shape: f32[1,128], index: 2, kind: input, shape index: {}]
  %s3 = inlined_call_operand.hbm [shape: f32[2,8,8,128], index: 3, kind: output, shape index: {}]
  %s4 = sld [smem:[#allocation0]]
  $region53: #{tpu_custom_call.1} parent=0
    _
  %s6 = ssub.s32 1, %s4
  %s7 = scalar_select 0, %s6, %s4
  $region1: #{tpu_custom_call.1} parent=0
    #allocation3 [shape = 'u8[65536]{0}', space=vmem, size = 0x10000, scoped, tag = 'input window, operand 0']
    #allocation4 [shape = 's32[2]{0}', space=sflag, size = 0x8, scoped, tag = 'scoped memory for tpu_custom_call.1']
    #allocation5 [shape = 's32[2]{0}', space=sflag, size = 0x8, scoped, tag = 'scoped memory for tpu_custom_call.1']
    #allocation6 [shape = 'u8[8192]{0}', space=vmem, size = 0x2000, scoped, tag = 'input window, operand 1, single buffered']
    #allocation7 [shape = 's32[1]{0}', space=sflag, size = 0x4, scoped, tag = 'scoped memory for tpu_custom_call.1']
    #allocation8 [shape = 'u8[65536]{0}', space=vmem, size = 0x10000, scoped, tag = 'output window, operand 0']
    %8 = vsyncpa [#allocation4], 0
    %s9 = scalar_lea.sflag [#allocation4], 1
    %10 = vsyncpa %s9, 0
    %11 = vsyncpa [#allocation7], 0
    %12 = vsyncpa [#allocation5], 0
    %s13 = scalar_lea.sflag [#allocation5], 1
    %14 = vsyncpa %s13, 0
    loop: start=0, step=1, limit=4
    $region2: #{tpu_custom_call.1} parent=1 // loop_pre_header
      _
    $region3: #{tpu_custom_call.1} parent=1 // loop_header
      %s16 = sphi 0, %s20
      %p17 = scmp.ge.s32.totalorder %s16, 4
      %s23 = sphi 0, %s35
      %s24 = sphi 0, %s31
      %s25 = sphi 0, %s23
      %s26 = sphi 0, %s24
      %s27 = sphi 0, %s25
      %s28 = sphi 0, %s26
      %s40 = sphi 0, %s42
      %s43 = sphi 0, %s40
      %s44 = sphi 0, %s43
      %s60 = sphi 0, %s44
      %s66 = sphi 0, %s68
      %s69 = sphi 0, %s66
      %s70 = sphi 0, %s69
      %s86 = sphi 0, %s70
      %s92 = sphi 0, %s94
      %s95 = sphi 0, %s92
      %s96 = sphi 0, %s95
      %s112 = sphi 0, %s96
      %s120 = sphi 0, %s122
      %s123 = sphi 0, %s120
      %s124 = sphi 0, %s123
      %s140 = sphi 0, %s124
    $region4: #{tpu_custom_call.1} parent=1 // loop_header_branch
      %19 = sbr.rel (%p17) target = $region8
    $region5: #{tpu_custom_call.1} parent=1 // loop_body
      %s21 = ssub.s32 %s16, 1
      %s22 = ssub.s32 %s16, 2
      %s29 = sadd.s32 1, %s24
      %p30 = scmp.ge.s32.totalorder %s29, 1
      %s31 = scalar_select %p30, 0, %s29
      %s32 = sadd.s32 1, %s23
      %s33 = scalar_select %p30, %s32, %s23
      %p34 = scmp.ge.s32.totalorder %s33, 2
      %s35 = scalar_select %p34, 0, %s33
      %s36 = ssub.s32 %s23, %s35
      %s37 = ssub.s32 %s24, %s31
      %s38 = sor.u32 %s36, %s37
      %p39 = scmp.eq.s32.totalorder %s38, 0
      %s41 = sadd.s32 %s40, 1
      %s42 = scalar_select %p39, %s40, %s41
      %p45 = pneg %p39
      %p46 = scmp.eq.s32.totalorder %s16, 1
      %p47 = por %p45, %p46
      %p48 = scmp.ne.s32.totalorder %s40, %s43
      %p49 = scmp.eq.s32.totalorder %s16, 0
      %p50 = por %p48, %p49
      %p51 = scmp.ne.s32.totalorder %s40, %s43
      %p52 = scmp.eq.s32.totalorder %s21, 1
      %p53 = por %p51, %p52
      %p54 = scmp.ne.s32.totalorder %s43, %s44
      %p55 = scmp.eq.s32.totalorder %s21, 0
      %p56 = por %p54, %p55
      %p57 = scmp.ne.s32.totalorder %s43, %s44
      %p58 = scmp.eq.s32.totalorder %s22, 1
      %p59 = por %p57, %p58
      %p61 = scmp.ne.s32.totalorder %s44, %s60
      %p62 = scmp.eq.s32.totalorder %s22, 0
      %p63 = por %p61, %p62
      %s64 = ssub.s32 %s24, %s31
      %p65 = scmp.eq.s32.totalorder %s64, 0
      %s67 = sadd.s32 %s66, 1
      %s68 = scalar_select %p65, %s66, %s67
      %p71 = pneg %p65
      %p72 = scmp.eq.s32.totalorder %s16, 1
      %p73 = por %p71, %p72
      %p74 = scmp.ne.s32.totalorder %s66, %s69
      %p75 = scmp.eq.s32.totalorder %s16, 0
      %p76 = por %p74, %p75
      %p77 = scmp.ne.s32.totalorder %s66, %s69
      %p78 = scmp.eq.s32.totalorder %s21, 1
      %p79 = por %p77, %p78
      %p80 = scmp.ne.s32.totalorder %s69, %s70
      %p81 = scmp.eq.s32.totalorder %s21, 0
      %p82 = por %p80, %p81
      %p83 = scmp.ne.s32.totalorder %s69, %s70
      %p84 = scmp.eq.s32.totalorder %s22, 1
      %p85 = por %p83, %p84
      %p87 = scmp.ne.s32.totalorder %s70, %s86
      %p88 = scmp.eq.s32.totalorder %s22, 0
      %p89 = por %p87, %p88
      %s90 = ssub.s32 %s24, %s31
      %p91 = scmp.eq.s32.totalorder %s90, 0
      %s93 = sadd.s32 %s92, 1
      %s94 = scalar_select %p91, %s92, %s93
      %p97 = pneg %p91
      %p98 = scmp.eq.s32.totalorder %s16, 1
      %p99 = por %p97, %p98
      %p100 = scmp.ne.s32.totalorder %s92, %s95
      %p101 = scmp.eq.s32.totalorder %s16, 0
      %p102 = por %p100, %p101
      %p103 = scmp.ne.s32.totalorder %s92, %s95
      %p104 = scmp.eq.s32.totalorder %s21, 1
      %p105 = por %p103, %p104
      %p106 = scmp.ne.s32.totalorder %s95, %s96
      %p107 = scmp.eq.s32.totalorder %s21, 0
      %p108 = por %p106, %p107
      %p109 = scmp.ne.s32.totalorder %s95, %s96
      %p110 = scmp.eq.s32.totalorder %s22, 1
      %p111 = por %p109, %p110
      %p113 = scmp.ne.s32.totalorder %s96, %s112
      %p114 = scmp.eq.s32.totalorder %s22, 0
      %p115 = por %p113, %p114
      %s116 = ssub.s32 %s23, %s35
      %s117 = ssub.s32 %s24, %s31
      %s118 = sor.u32 %s116, %s117
      %p119 = scmp.eq.s32.totalorder %s118, 0
      %s121 = sadd.s32 %s120, 1
      %s122 = scalar_select %p119, %s120, %s121
      %p125 = pneg %p119
      %p126 = scmp.eq.s32.totalorder %s16, 1
      %p127 = por %p125, %p126
      %p128 = scmp.ne.s32.totalorder %s120, %s123
      %p129 = scmp.eq.s32.totalorder %s16, 0
      %p130 = por %p128, %p129
      %p131 = scmp.ne.s32.totalorder %s120, %s123
      %p132 = scmp.eq.s32.totalorder %s21, 1
      %p133 = por %p131, %p132
      %p134 = scmp.ne.s32.totalorder %s123, %s124
      %p135 = scmp.eq.s32.totalorder %s21, 0
      %p136 = por %p134, %p135
      %p137 = scmp.ne.s32.totalorder %s123, %s124
      %p138 = scmp.eq.s32.totalorder %s22, 1
      %p139 = por %p137, %p138
      %p141 = scmp.ne.s32.totalorder %s124, %s140
      %p142 = scmp.eq.s32.totalorder %s22, 0
      %p143 = por %p141, %p142
      %p144 = scmp.le.s32.totalorder 1, %s16
      %p145 = scmp.lt.s32.totalorder %s16, 3
      %p146 = pnand %p144, %p145
      %p147 = pneg %p146
      // Predicated region
      $region9: #{tpu_custom_call.1} parent=5 // pred_check
        _
      $region10: #{tpu_custom_call.1} parent=5 // pred_check_branch
        %149 = sbr.rel (%p146) target = $region12
      $region11: #{tpu_custom_call.1} parent=5 // pred_region
        %s150 = ssub.s32 %s16, 1
        // Predicated region
        $region13: #{tpu_custom_call.1} parent=11 // pred_check
          %p151 = pneg %p82
        $region14: #{tpu_custom_call.1} parent=11 // pred_check_branch
          %153 = sbr.rel (%p151) target = $region16
        $region15: #{tpu_custom_call.1} parent=11 // pred_region
          %155 = vsyncadd [#allocation7], 0
          %s156 = smul.addr %s26, 8
          %s157 = scalar_lea.hbm %s1, %s156
          %s158 = sshll.u32 %s157, 4
          %s159 = int_to_ptr.hbm [resolvable:$true] %s158
          %s160 = sshll.u32 [#allocation6], 4
          %s161 = int_to_ptr.vmem [resolvable:$true] %s160
          %166 = dma.hbm_to_vmem [thread:$0]  %s159, 256, %s161, [#allocation7], 128, 128, 8
        $region16: #{tpu_custom_call.1} parent=11 // pred_fallthru
          _
        // Predicated region
        $region17: #{tpu_custom_call.1} parent=11 // pred_check
          %p167 = pneg %p108
        $region18: #{tpu_custom_call.1} parent=11 // pred_check_branch
          %169 = sbr.rel (%p167) target = $region20
        $region19: #{tpu_custom_call.1} parent=11 // pred_region
          %p170 = scmp.lt.s32.totalorder %s26, 0
          %s171 = scalar_select %p170, %s26, 0
          %s172 = scalar_lea.vmem %s2, %s171
        $region20: #{tpu_custom_call.1} parent=11 // pred_fallthru
          _
      $region12: #{tpu_custom_call.1} parent=5 // pred_fallthru
        _
      %p173 = scmp.lt.s32.totalorder %s16, 2
      // Predicated region
      $region21: #{tpu_custom_call.1} parent=5 // pred_check
        %p174 = pneg %p173
      $region22: #{tpu_custom_call.1} parent=5 // pred_check_branch
        %176 = sbr.rel (%p174) target = $region24
      $region23: #{tpu_custom_call.1} parent=5 // pred_region
        // Predicated region
        $region25: #{tpu_custom_call.1} parent=23 // pred_check
          %p177 = pneg %p50
        $region26: #{tpu_custom_call.1} parent=23 // pred_check_branch
          %179 = sbr.rel (%p177) target = $region28
        $region27: #{tpu_custom_call.1} parent=23 // pred_region
          %s180 = sand.u32 %s40, 1
          %s181 = scalar_lea.sflag [#allocation4], %s180
          %s182 = sand.u32 %s40, 1
          %s183 = smul.addr %s182, 64
          %s184 = scalar_lea.vmem [#allocation3], %s183
          %186 = vsyncadd %s181, 0
          %s187 = smul.addr %s23, 8
          %s188 = sadd.s32 %s24, %s187
          %s189 = smul.addr %s188, 8
          %s190 = scalar_lea.hbm %s0, %s189
          %s191 = sshll.u32 %s190, 4
          %s192 = int_to_ptr.hbm [resolvable:$true] %s191
          %s193 = sshll.u32 %s184, 4
          %s194 = int_to_ptr.vmem [resolvable:$true] %s193
          %199 = dma.hbm_to_vmem [thread:$0]  %s192, 1024, %s194, %s181, 128, 128, 8
        $region28: #{tpu_custom_call.1} parent=23 // pred_fallthru
          _
      $region24: #{tpu_custom_call.1} parent=5 // pred_fallthru
        _
      %p200 = scmp.le.s32.totalorder 1, %s16
      %p201 = scmp.lt.s32.totalorder %s16, 3
      %p202 = pnand %p200, %p201
      %p203 = pneg %p202
      // Predicated region
      $region29: #{tpu_custom_call.1} parent=5 // pred_check
        _
      $region30: #{tpu_custom_call.1} parent=5 // pred_check_branch
        %205 = sbr.rel (%p202) target = $region32
      $region31: #{tpu_custom_call.1} parent=5 // pred_region
        %s206 = ssub.s32 %s16, 1
        %s207 = sand.u32 %s43, 1
        %s208 = scalar_lea.sflag [#allocation4], %s207
        %s209 = sand.u32 %s43, 1
        %s210 = smul.addr %s209, 64
        %s211 = scalar_lea.vmem [#allocation3], %s210
        // Predicated region
        $region33: #{tpu_custom_call.1} parent=31 // pred_check
          %p212 = pneg %p56
        $region34: #{tpu_custom_call.1} parent=31 // pred_check_branch
          %214 = sbr.rel (%p212) target = $region36
        $region35: #{tpu_custom_call.1} parent=31 // pred_region
          %216 = dma.done %s208, 1024
        $region36: #{tpu_custom_call.1} parent=31 // pred_fallthru
          _
        // Predicated region
        $region37: #{tpu_custom_call.1} parent=31 // pred_check
          %p217 = pneg %p82
        $region38: #{tpu_custom_call.1} parent=31 // pred_check_branch
          %219 = sbr.rel (%p217) target = $region40
        $region39: #{tpu_custom_call.1} parent=31 // pred_region
          %221 = dma.done [#allocation7], 256
        $region40: #{tpu_custom_call.1} parent=31 // pred_fallthru
          _
        %s222 = sand.u32 %s43, 1
        %s223 = scalar_lea.sflag [#allocation4], %s222
        %s224 = sand.u32 %s43, 1
        %s225 = smul.addr %s224, 64
        %s226 = scalar_lea.vmem [#allocation3], %s225
        %p227 = pneg %p56
        %p228 = pneg %p53
        %p229 = pneg %p82
        %p230 = pneg %p79
        %p231 = scmp.lt.s32.totalorder %s26, 0
        %s232 = scalar_select %p231, %s26, 0
        %s233 = scalar_lea.vmem %s2, %s232
        %p234 = pneg %p108
        %p235 = pneg %p105
        %p236 = pneg %p136
        %p237 = pneg %p133
        %s238 = sand.u32 %s123, 1
        %s239 = scalar_lea.sflag [#allocation5], %s238
        %s240 = sand.u32 %s123, 1
        %s241 = smul.addr %s240, 64
        %s242 = scalar_lea.vmem [#allocation8], %s241
        %p243 = scmp.lt.s32.totalorder %s26, 0
        %s244 = scalar_select %p243, %s26, 0
        %s245 = scalar_lea.vmem %s2, %s244
        %246 = vst [vmem:[#allocation2] sm:$0xff] 0.0
        %247 = vst [vmem:[#allocation2 + $0x8] sm:$0xff] 0.0
        %s248 = scalar_lea.vmem [#allocation2], 144
        %249 = vst [vmem:[%s248] sm:$0xff] 0.0
        %250 = vst [vmem:[%s248 + $0x8] sm:$0xff] 0.0
        %s251 = scalar_lea.vmem [#allocation2], 16
        %252 = vst [vmem:[%s251 + $0x8] sm:$0xff] 0.0
        %253 = vst [vmem:[%s251 + $0x18] sm:$0xff] 0.0
        %254 = vst [vmem:[%s251 + $0x28] sm:$0xff] 0.0
        %255 = vst [vmem:[%s251 + $0x38] sm:$0xff] 0.0
        %256 = vst [vmem:[%s251 + $0x48] sm:$0xff] 0.0
        %257 = vst [vmem:[%s251 + $0x58] sm:$0xff] 0.0
        %258 = vst [vmem:[%s251 + $0x68] sm:$0xff] 0.0
        %259 = vst [vmem:[%s251 + $0x78] sm:$0xff] 0.0
        %v260 = vld [vmem:[%s211] sm:$0xff]
        %v261 = vld [vmem:[%s211 + $0x8] sm:$0xff]
        %v262 = vld [vmem:[%s211 + $0x10] sm:$0xff]
        %v263 = vld [vmem:[%s211 + $0x18] sm:$0xff]
        %v264 = vld [vmem:[%s211 + $0x20] sm:$0xff]
        %v265 = vld [vmem:[%s211 + $0x28] sm:$0xff]
        %v266 = vld [vmem:[%s211 + $0x30] sm:$0xff]
        %v267 = vld [vmem:[%s211 + $0x38] sm:$0xff]
        %268 = vst [vmem:[%s251] sm:$0xff] %v260
        %269 = vst [vmem:[%s251 + $0x10] sm:$0xff] %v261
        %270 = vst [vmem:[%s251 + $0x20] sm:$0xff] %v262
        %271 = vst [vmem:[%s251 + $0x30] sm:$0xff] %v263
        %272 = vst [vmem:[%s251 + $0x40] sm:$0xff] %v264
        %273 = vst [vmem:[%s251 + $0x50] sm:$0xff] %v265
        %274 = vst [vmem:[%s251 + $0x60] sm:$0xff] %v266
        %275 = vst [vmem:[%s251 + $0x70] sm:$0xff] %v267
        %v276 = vld [vmem:[%s245] sm:$0x1]
        %v277 = vld [vmem:[#allocation2] sm:$0xff]
        %v278 = vld [vmem:[#allocation2 + $0x8] sm:$0xff]
        %v279 = vld [vmem:[#allocation2 + $0x10] sm:$0xff]
        %v280 = vld [vmem:[#allocation2 + $0x18] sm:$0xff]
        %v281 = vld [vmem:[#allocation2 + $0x20] sm:$0xff]
        %v282 = vld [vmem:[#allocation2 + $0x28] sm:$0xff]
        %v283 = vld [vmem:[#allocation2 + $0x30] sm:$0xff]
        %v284 = vld [vmem:[#allocation2 + $0x38] sm:$0xff]
        %v285 = vld [vmem:[#allocation2 + $0x40] sm:$0xff]
        %v286 = vld [vmem:[#allocation2 + $0x48] sm:$0xff]
        %v287 = vld [vmem:[#allocation2 + $0x50] sm:$0xff]
        %v288 = vld [vmem:[#allocation2 + $0x58] sm:$0xff]
        %v289 = vld [vmem:[#allocation2 + $0x60] sm:$0xff]
        %v290 = vld [vmem:[#allocation2 + $0x68] sm:$0xff]
        %v291 = vld [vmem:[#allocation2 + $0x70] sm:$0xff]
        %v292 = vld [vmem:[#allocation2 + $0x78] sm:$0xff]
        %v293 = vrot.slane %v277, 7
        %v294 = vrot.slane %v278, 7
        %v295 = vrot.slane %v279, 7
        %v296 = vrot.slane %v280, 7
        %v297 = vrot.slane %v281, 7
        %v298 = vrot.slane %v282, 7
        %v299 = vrot.slane %v283, 7
        %v300 = vrot.slane %v284, 7
        %v301 = vrot.slane %v285, 7
        %v302 = vrot.slane %v286, 7
        %v303 = vrot.slane %v287, 7
        %v304 = vrot.slane %v288, 7
        %v305 = vrot.slane %v289, 7
        %v306 = vrot.slane %v290, 7
        %v307 = vrot.slane %v291, 7
        %v308 = vrot.slane %v292, 7
        %v309 = vlaneseq
        %v310 = vshrl.u32 %v309, 7
        %vm311 = vcmp.lt.s32.totalorder %v310, 1
        %v312 = vsel %vm311, %v306, %v307
        %v313 = vsel %vm311, %v304, %v305
        %v314 = vsel %vm311, %v302, %v303
        %v315 = vsel %vm311, %v300, %v301
        %v316 = vsel %vm311, %v298, %v299
        %v317 = vsel %vm311, %v296, %v297
        %v318 = vsel %vm311, %v294, %v295
        %v319 = vsel %vm311, %v308, %v293
        %v320 = vld [vmem:[#allocation6] sm:$0x1]
        %v321 = vperm.slane %v320, 0
        %v322 = vmul.f32 %v319, %v321
        %v323 = vmul.f32 %v318, %v321
        %v324 = vmul.f32 %v317, %v321
        %v325 = vmul.f32 %v316, %v321
        %v326 = vmul.f32 %v315, %v321
        %v327 = vmul.f32 %v314, %v321
        %v328 = vmul.f32 %v313, %v321
        %v329 = vmul.f32 %v312, %v321
        %v330 = vld [vmem:[#allocation6 + $0x1] sm:$0x1]
        %v331 = vperm.slane %v330, 0
        %v332 = vmul.f32 %v277, %v331
        %v333 = vmul.f32 %v279, %v331
        %v334 = vmul.f32 %v281, %v331
        %v335 = vmul.f32 %v283, %v331
        %v336 = vmul.f32 %v285, %v331
        %v337 = vmul.f32 %v287, %v331
        %v338 = vmul.f32 %v289, %v331
        %v339 = vmul.f32 %v291, %v331
        %v340 = vadd.f32 %v322, %v332
        %v341 = vadd.f32 %v323, %v333
        %v342 = vadd.f32 %v324, %v334
        %v343 = vadd.f32 %v325, %v335
        %v344 = vadd.f32 %v326, %v336
        %v345 = vadd.f32 %v327, %v337
        %v346 = vadd.f32 %v328, %v338
        %v347 = vadd.f32 %v329, %v339
        %v348 = vrot.slane %v277, 1
        %v349 = vrot.slane %v278, 1
        %v350 = vrot.slane %v279, 1
        %v351 = vrot.slane %v280, 1
        %v352 = vrot.slane %v281, 1
        %v353 = vrot.slane %v282, 1
        %v354 = vrot.slane %v283, 1
        %v355 = vrot.slane %v284, 1
        %v356 = vrot.slane %v285, 1
        %v357 = vrot.slane %v286, 1
        %v358 = vrot.slane %v287, 1
        %v359 = vrot.slane %v288, 1
        %v360 = vrot.slane %v289, 1
        %v361 = vrot.slane %v290, 1
        %v362 = vrot.slane %v291, 1
        %v363 = vrot.slane %v292, 1
        %vm364 = vcmp.lt.s32.totalorder %v310, 7
        %v365 = vsel %vm364, %v362, %v363
        %v366 = vsel %vm364, %v360, %v361
        %v367 = vsel %vm364, %v358, %v359
        %v368 = vsel %vm364, %v356, %v357
        %v369 = vsel %vm364, %v354, %v355
        %v370 = vsel %vm364, %v352, %v353
        %v371 = vsel %vm364, %v350, %v351
        %v372 = vsel %vm364, %v348, %v349
        %v373 = vld [vmem:[#allocation6 + $0x2] sm:$0x1]
        %v374 = vperm.slane %v373, 0
        %v375 = vmul.f32 %v372, %v374
        %v376 = vmul.f32 %v371, %v374
        %v377 = vmul.f32 %v370, %v374
        %v378 = vmul.f32 %v369, %v374
        %v379 = vmul.f32 %v368, %v374
        %v380 = vmul.f32 %v367, %v374
        %v381 = vmul.f32 %v366, %v374
        %v382 = vmul.f32 %v365, %v374
        %v383 = vadd.f32 %v340, %v375
        %v384 = vadd.f32 %v341, %v376
        %v385 = vadd.f32 %v342, %v377
        %v386 = vadd.f32 %v343, %v378
        %v387 = vadd.f32 %v344, %v379
        %v388 = vadd.f32 %v345, %v380
        %v389 = vadd.f32 %v346, %v381
        %v390 = vadd.f32 %v347, %v382
        %v391 = vld [vmem:[%s251] sm:$0xff]
        %v392 = vld [vmem:[%s251 + $0x8] sm:$0xff]
        %v393 = vld [vmem:[%s251 + $0x10] sm:$0xff]
        %v394 = vld [vmem:[%s251 + $0x18] sm:$0xff]
        %v395 = vld [vmem:[%s251 + $0x20] sm:$0xff]
        %v396 = vld [vmem:[%s251 + $0x28] sm:$0xff]
        %v397 = vld [vmem:[%s251 + $0x30] sm:$0xff]
        %v398 = vld [vmem:[%s251 + $0x38] sm:$0xff]
        %v399 = vld [vmem:[%s251 + $0x40] sm:$0xff]
        %v400 = vld [vmem:[%s251 + $0x48] sm:$0xff]
        %v401 = vld [vmem:[%s251 + $0x50] sm:$0xff]
        %v402 = vld [vmem:[%s251 + $0x58] sm:$0xff]
        %v403 = vld [vmem:[%s251 + $0x60] sm:$0xff]
        %v404 = vld [vmem:[%s251 + $0x68] sm:$0xff]
        %v405 = vld [vmem:[%s251 + $0x70] sm:$0xff]
        %v406 = vld [vmem:[%s251 + $0x78] sm:$0xff]
        %v407 = vrot.slane %v391, 7
        %v408 = vrot.slane %v392, 7
        %v409 = vrot.slane %v393, 7
        %v410 = vrot.slane %v394, 7
        %v411 = vrot.slane %v395, 7
        %v412 = vrot.slane %v396, 7
        %v413 = vrot.slane %v397, 7
        %v414 = vrot.slane %v398, 7
        %v415 = vrot.slane %v399, 7
        %v416 = vrot.slane %v400, 7
        %v417 = vrot.slane %v401, 7
        %v418 = vrot.slane %v402, 7
        %v419 = vrot.slane %v403, 7
        %v420 = vrot.slane %v404, 7
        %v421 = vrot.slane %v405, 7
        %v422 = vrot.slane %v406, 7
        %v423 = vsel %vm311, %v420, %v421
        %v424 = vsel %vm311, %v418, %v419
        %v425 = vsel %vm311, %v416, %v417
        %v426 = vsel %vm311, %v414, %v415
        %v427 = vsel %vm311, %v412, %v413
        %v428 = vsel %vm311, %v410, %v411
        %v429 = vsel %vm311, %v408, %v409
        %v430 = vsel %vm311, %v422, %v407
        %v431 = vld [vmem:[#allocation6 + $0x3] sm:$0x1]
        %v432 = vperm.slane %v431, 0
        %v433 = vmul.f32 %v430, %v432
        %v434 = vmul.f32 %v429, %v432
        %v435 = vmul.f32 %v428, %v432
        %v436 = vmul.f32 %v427, %v432
        %v437 = vmul.f32 %v426, %v432
        %v438 = vmul.f32 %v425, %v432
        %v439 = vmul.f32 %v424, %v432
        %v440 = vmul.f32 %v423, %v432
        %v441 = vadd.f32 %v383, %v433
        %v442 = vadd.f32 %v384, %v434
        %v443 = vadd.f32 %v385, %v435
        %v444 = vadd.f32 %v386, %v436
        %v445 = vadd.f32 %v387, %v437
        %v446 = vadd.f32 %v388, %v438
        %v447 = vadd.f32 %v389, %v439
        %v448 = vadd.f32 %v390, %v440
        %v449 = vld [vmem:[#allocation6 + $0x4] sm:$0x1]
        %v450 = vperm.slane %v449, 0
        %v451 = vmul.f32 %v391, %v450
        %v452 = vmul.f32 %v393, %v450
        %v453 = vmul.f32 %v395, %v450
        %v454 = vmul.f32 %v397, %v450
        %v455 = vmul.f32 %v399, %v450
        %v456 = vmul.f32 %v401, %v450
        %v457 = vmul.f32 %v403, %v450
        %v458 = vmul.f32 %v405, %v450
        %v459 = vadd.f32 %v441, %v451
        %v460 = vadd.f32 %v442, %v452
        %v461 = vadd.f32 %v443, %v453
        %v462 = vadd.f32 %v444, %v454
        %v463 = vadd.f32 %v445, %v455
        %v464 = vadd.f32 %v446, %v456
        %v465 = vadd.f32 %v447, %v457
        %v466 = vadd.f32 %v448, %v458
        %v467 = vrot.slane %v391, 1
        %v468 = vrot.slane %v392, 1
        %v469 = vrot.slane %v393, 1
        %v470 = vrot.slane %v394, 1
        %v471 = vrot.slane %v395, 1
        %v472 = vrot.slane %v396, 1
        %v473 = vrot.slane %v397, 1
        %v474 = vrot.slane %v398, 1
        %v475 = vrot.slane %v399, 1
        %v476 = vrot.slane %v400, 1
        %v477 = vrot.slane %v401, 1
        %v478 = vrot.slane %v402, 1
        %v479 = vrot.slane %v403, 1
        %v480 = vrot.slane %v404, 1
        %v481 = vrot.slane %v405, 1
        %v482 = vrot.slane %v406, 1
        %v483 = vsel %vm364, %v481, %v482
        %v484 = vsel %vm364, %v479, %v480
        %v485 = vsel %vm364, %v477, %v478
        %v486 = vsel %vm364, %v475, %v476
        %v487 = vsel %vm364, %v473, %v474
        %v488 = vsel %vm364, %v471, %v472
        %v489 = vsel %vm364, %v469, %v470
        %v490 = vsel %vm364, %v467, %v468
        %v491 = vld [vmem:[#allocation6 + $0x5] sm:$0x1]
        %v492 = vperm.slane %v491, 0
        %v493 = vmul.f32 %v490, %v492
        %v494 = vmul.f32 %v489, %v492
        %v495 = vmul.f32 %v488, %v492
        %v496 = vmul.f32 %v487, %v492
        %v497 = vmul.f32 %v486, %v492
        %v498 = vmul.f32 %v485, %v492
        %v499 = vmul.f32 %v484, %v492
        %v500 = vmul.f32 %v483, %v492
        %v501 = vadd.f32 %v459, %v493
        %v502 = vadd.f32 %v460, %v494
        %v503 = vadd.f32 %v461, %v495
        %v504 = vadd.f32 %v462, %v496
        %v505 = vadd.f32 %v463, %v497
        %v506 = vadd.f32 %v464, %v498
        %v507 = vadd.f32 %v465, %v499
        %v508 = vadd.f32 %v466, %v500
        %s509 = scalar_lea.vmem [#allocation2], 32
        %v510 = vld [vmem:[%s509] sm:$0xff]
        %v511 = vld [vmem:[%s509 + $0x8] sm:$0xff]
        %v512 = vld [vmem:[%s509 + $0x10] sm:$0xff]
        %v513 = vld [vmem:[%s509 + $0x18] sm:$0xff]
        %v514 = vld [vmem:[%s509 + $0x20] sm:$0xff]
        %v515 = vld [vmem:[%s509 + $0x28] sm:$0xff]
        %v516 = vld [vmem:[%s509 + $0x30] sm:$0xff]
        %v517 = vld [vmem:[%s509 + $0x38] sm:$0xff]
        %v518 = vld [vmem:[%s509 + $0x40] sm:$0xff]
        %v519 = vld [vmem:[%s509 + $0x48] sm:$0xff]
        %v520 = vld [vmem:[%s509 + $0x50] sm:$0xff]
        %v521 = vld [vmem:[%s509 + $0x58] sm:$0xff]
        %v522 = vld [vmem:[%s509 + $0x60] sm:$0xff]
        %v523 = vld [vmem:[%s509 + $0x68] sm:$0xff]
        %v524 = vld [vmem:[%s509 + $0x70] sm:$0xff]
        %v525 = vld [vmem:[%s509 + $0x78] sm:$0xff]
        %v526 = vrot.slane %v510, 7
        %v527 = vrot.slane %v511, 7
        %v528 = vrot.slane %v512, 7
        %v529 = vrot.slane %v513, 7
        %v530 = vrot.slane %v514, 7
        %v531 = vrot.slane %v515, 7
        %v532 = vrot.slane %v516, 7
        %v533 = vrot.slane %v517, 7
        %v534 = vrot.slane %v518, 7
        %v535 = vrot.slane %v519, 7
        %v536 = vrot.slane %v520, 7
        %v537 = vrot.slane %v521, 7
        %v538 = vrot.slane %v522, 7
        %v539 = vrot.slane %v523, 7
        %v540 = vrot.slane %v524, 7
        %v541 = vrot.slane %v525, 7
        %v542 = vsel %vm311, %v539, %v540
        %v543 = vsel %vm311, %v537, %v538
        %v544 = vsel %vm311, %v535, %v536
        %v545 = vsel %vm311, %v533, %v534
        %v546 = vsel %vm311, %v531, %v532
        %v547 = vsel %vm311, %v529, %v530
        %v548 = vsel %vm311, %v527, %v528
        %v549 = vsel %vm311, %v541, %v526
        %v550 = vld [vmem:[#allocation6 + $0x6] sm:$0x1]
        %v551 = vperm.slane %v550, 0
        %v552 = vmul.f32 %v549, %v551
        %v553 = vmul.f32 %v548, %v551
        %v554 = vmul.f32 %v547, %v551
        %v555 = vmul.f32 %v546, %v551
        %v556 = vmul.f32 %v545, %v551
        %v557 = vmul.f32 %v544, %v551
        %v558 = vmul.f32 %v543, %v551
        %v559 = vmul.f32 %v542, %v551
        %v560 = vadd.f32 %v501, %v552
        %v561 = vadd.f32 %v502, %v553
        %v562 = vadd.f32 %v503, %v554
        %v563 = vadd.f32 %v504, %v555
        %v564 = vadd.f32 %v505, %v556
        %v565 = vadd.f32 %v506, %v557
        %v566 = vadd.f32 %v507, %v558
        %v567 = vadd.f32 %v508, %v559
        %v568 = vld [vmem:[#allocation6 + $0x7] sm:$0x1]
        %v569 = vperm.slane %v568, 0
        %v570 = vmul.f32 %v510, %v569
        %v571 = vmul.f32 %v512, %v569
        %v572 = vmul.f32 %v514, %v569
        %v573 = vmul.f32 %v516, %v569
        %v574 = vmul.f32 %v518, %v569
        %v575 = vmul.f32 %v520, %v569
        %v576 = vmul.f32 %v522, %v569
        %v577 = vmul.f32 %v524, %v569
        %v578 = vadd.f32 %v560, %v570
        %v579 = vadd.f32 %v561, %v571
        %v580 = vadd.f32 %v562, %v572
        %v581 = vadd.f32 %v563, %v573
        %v582 = vadd.f32 %v564, %v574
        %v583 = vadd.f32 %v565, %v575
        %v584 = vadd.f32 %v566, %v576
        %v585 = vadd.f32 %v567, %v577
        %v586 = vrot.slane %v510, 1
        %v587 = vrot.slane %v511, 1
        %v588 = vrot.slane %v512, 1
        %v589 = vrot.slane %v513, 1
        %v590 = vrot.slane %v514, 1
        %v591 = vrot.slane %v515, 1
        %v592 = vrot.slane %v516, 1
        %v593 = vrot.slane %v517, 1
        %v594 = vrot.slane %v518, 1
        %v595 = vrot.slane %v519, 1
        %v596 = vrot.slane %v520, 1
        %v597 = vrot.slane %v521, 1
        %v598 = vrot.slane %v522, 1
        %v599 = vrot.slane %v523, 1
        %v600 = vrot.slane %v524, 1
        %v601 = vrot.slane %v525, 1
        %v602 = vsel %vm364, %v600, %v601
        %v603 = vsel %vm364, %v598, %v599
        %v604 = vsel %vm364, %v596, %v597
        %v605 = vsel %vm364, %v594, %v595
        %v606 = vsel %vm364, %v592, %v593
        %v607 = vsel %vm364, %v590, %v591
        %v608 = vsel %vm364, %v588, %v589
        %v609 = vsel %vm364, %v586, %v587
        %v610 = vld [vmem:[#allocation6 + $0x8] sm:$0x1]
        %v611 = vperm.slane %v610, 0
        %v612 = vmul.f32 %v609, %v611
        %v613 = vmul.f32 %v608, %v611
        %v614 = vmul.f32 %v607, %v611
        %v615 = vmul.f32 %v606, %v611
        %v616 = vmul.f32 %v605, %v611
        %v617 = vmul.f32 %v604, %v611
        %v618 = vmul.f32 %v603, %v611
        %v619 = vmul.f32 %v602, %v611
        %v620 = vadd.f32 %v578, %v612
        %v621 = vadd.f32 %v579, %v613
        %v622 = vadd.f32 %v580, %v614
        %v623 = vadd.f32 %v581, %v615
        %v624 = vadd.f32 %v582, %v616
        %v625 = vadd.f32 %v583, %v617
        %v626 = vadd.f32 %v584, %v618
        %v627 = vadd.f32 %v585, %v619
        %v629 = vperm.slane %v276, 0
        %v631 = vadd.f32 %v620, %v629
        %v632 = vadd.f32 %v621, %v629
        %v633 = vadd.f32 %v622, %v629
        %v634 = vadd.f32 %v623, %v629
        %v635 = vadd.f32 %v624, %v629
        %v636 = vadd.f32 %v625, %v629
        %v637 = vadd.f32 %v626, %v629
        %v638 = vadd.f32 %v627, %v629
        %v639 = vld [vmem:[%s211] sm:$0xff]
        %v640 = vld [vmem:[%s211 + $0x8] sm:$0xff]
        %v641 = vld [vmem:[%s211 + $0x10] sm:$0xff]
        %v642 = vld [vmem:[%s211 + $0x18] sm:$0xff]
        %v643 = vld [vmem:[%s211 + $0x20] sm:$0xff]
        %v644 = vld [vmem:[%s211 + $0x28] sm:$0xff]
        %v645 = vld [vmem:[%s211 + $0x30] sm:$0xff]
        %v646 = vld [vmem:[%s211 + $0x38] sm:$0xff]
        %v647 = vadd.f32 %v631, %v639
        %v648 = vadd.f32 %v632, %v640
        %v649 = vadd.f32 %v633, %v641
        %v650 = vadd.f32 %v634, %v642
        %v651 = vadd.f32 %v635, %v643
        %v652 = vadd.f32 %v636, %v644
        %v653 = vadd.f32 %v637, %v645
        %v654 = vadd.f32 %v638, %v646
        %655 = vst [vmem:[%s242] sm:$0xff] %v647
        %656 = vst [vmem:[%s242 + $0x8] sm:$0xff] %v648
        %657 = vst [vmem:[%s242 + $0x10] sm:$0xff] %v649
        %658 = vst [vmem:[%s242 + $0x18] sm:$0xff] %v650
        %659 = vst [vmem:[%s242 + $0x20] sm:$0xff] %v651
        %660 = vst [vmem:[%s242 + $0x28] sm:$0xff] %v652
        %661 = vst [vmem:[%s242 + $0x30] sm:$0xff] %v653
        %662 = vst [vmem:[%s242 + $0x38] sm:$0xff] %v654
        %s663 = sand.u32 %s123, 1
        %s664 = scalar_lea.sflag [#allocation5], %s663
        %s665 = sand.u32 %s123, 1
        %s666 = smul.addr %s665, 64
        %s667 = scalar_lea.vmem [#allocation8], %s666
        // Predicated region
        $region41: #{tpu_custom_call.1} parent=31 // pred_check
          %p668 = pneg %p133
        $region42: #{tpu_custom_call.1} parent=31 // pred_check_branch
          %670 = sbr.rel (%p668) target = $region44
        $region43: #{tpu_custom_call.1} parent=31 // pred_region
          %672 = vsyncadd %s664, 0
          %s673 = smul.addr %s25, 8
          %s674 = sadd.s32 %s26, %s673
          %s675 = smul.addr %s674, 8
          %s676 = scalar_lea.hbm %s3, %s675
          %s677 = sshll.u32 %s667, 4
          %s678 = int_to_ptr.vmem [resolvable:$true] %s677
          %s679 = sshll.u32 %s676, 4
          %s680 = int_to_ptr.hbm [resolvable:$true] %s679
          %685 = dma.vmem_to_hbm [thread:$0]  %s678, 1024, %s680, %s664, 128, 128, 8
        $region44: #{tpu_custom_call.1} parent=31 // pred_fallthru
          _
      $region32: #{tpu_custom_call.1} parent=5 // pred_fallthru
        _
      %p686 = scmp.le.s32.totalorder 2, %s16
      // Predicated region
      $region45: #{tpu_custom_call.1} parent=5 // pred_check
        %p687 = pneg %p686
      $region46: #{tpu_custom_call.1} parent=5 // pred_check_branch
        %689 = sbr.rel (%p687) target = $region48
      $region47: #{tpu_custom_call.1} parent=5 // pred_region
        %s690 = ssub.s32 %s16, 2
        // Predicated region
        $region49: #{tpu_custom_call.1} parent=47 // pred_check
          %p691 = pneg %p139
        $region50: #{tpu_custom_call.1} parent=47 // pred_check_branch
          %693 = sbr.rel (%p691) target = $region52
        $region51: #{tpu_custom_call.1} parent=47 // pred_region
          %s694 = sand.u32 %s124, 1
          %s695 = scalar_lea.sflag [#allocation5], %s694
          %s696 = sand.u32 %s124, 1
          %s697 = smul.addr %s696, 64
          %s698 = scalar_lea.vmem [#allocation8], %s697
          %700 = dma.done %s695, 1024
        $region52: #{tpu_custom_call.1} parent=47 // pred_fallthru
          _
      $region48: #{tpu_custom_call.1} parent=5 // pred_fallthru
        _
    $region6: #{tpu_custom_call.1} parent=1 // loop_footer
      %s20 = sadd.s32 1, %s16
    $region7: #{tpu_custom_call.1} parent=1 // loop_footer_branch
      %15 = sbr.rel target = $region3
    $region8: #{tpu_custom_call.1} parent=1 // loop_exit
      _
    %701 = vsyncpa [#allocation4], 1
    %s702 = scalar_lea.sflag [#allocation4], 1
    %703 = vsyncpa %s702, 1
    %704 = vsyncpa [#allocation7], 1
    %705 = vsyncpa [#allocation5], 1
    %s706 = scalar_lea.sflag [#allocation5], 1
    %707 = vsyncpa %s706, 1

</llo_original>
